<compile_context>
chip_gen: v7x
topology: tpu7x:2x2x1
jax: 0.10.0
libtpu: 0.0.40
codegen_flags: <defaults>
</compile_context>

<pallas_src>
import functools
import math

import jax
import jax.numpy as jnp
from jax.experimental import pallas as pl
from jax.experimental.pallas import tpu as pltpu

_VMEM_LIMIT = 32 * 1024 * 1024  # explicit scoped-VMEM budget; safe on v5e/v6e/v7x


def _pick_tile(dim, target, align):
    """Largest tile <= target that divides dim and is `align`-aligned, else full dim."""
    if dim <= target:
        return dim
    t = max(align, (target // align) * align)
    while t > align and dim % t != 0:
        t -= align
    if dim % t != 0:
        return dim  # full extent is always legal
    return t


# --------------------------------------------------------------------------------------
# Linear (x @ Wt + b) kernel — used for the projection layers.
# --------------------------------------------------------------------------------------
def _linear_kernel(x_ref, w_ref, b_ref, o_ref, acc_ref):
    @pl.when(pl.program_id(2) == 0)
    def _():
        acc_ref[...] = jnp.zeros_like(acc_ref)

    acc_ref[...] += jnp.dot(
        x_ref[...].astype(jnp.bfloat16),           # bf16 MXU operands
        w_ref[...].astype(jnp.bfloat16),
        preferred_element_type=jnp.float32)        # f32 accumulate

    @pl.when(pl.program_id(2) == pl.num_programs(2) - 1)
    def _():
        o_ref[...] = (acc_ref[...] + b_ref[...].astype(jnp.float32)).astype(o_ref.dtype)


def linear_pallas(x2, wt, b, *, tm_target=256, tn_target=256, tk_target=512):
    """y = x2 @ wt + b, with wt in (in_features, out_features) layout (torch weight.T)."""
    M, K = x2.shape
    Kw, N = wt.shape
    assert K == Kw and b.shape == (N,)
    tm = _pick_tile(M, tm_target, 8)
    tn = _pick_tile(N, tn_target, 128)
    tk = _pick_tile(K, tk_target, 128)
    grid = (M // tm, N // tn, K // tk)
    return pl.pallas_call(
        _linear_kernel,
        out_shape=jax.ShapeDtypeStruct((M, N), x2.dtype),
        grid=grid,
        in_specs=[
            pl.BlockSpec((tm, tk), lambda i, j, k: (i, k)),   # x rows
            pl.BlockSpec((tk, tn), lambda i, j, k: (k, j)),   # W tiled over K and N
            pl.BlockSpec((1, tn), lambda i, j, k: (0, j)),    # bias
        ],
        out_specs=pl.BlockSpec((tm, tn), lambda i, j, k: (i, j)),
        scratch_shapes=[pltpu.VMEM((tm, tn), jnp.float32)],
        compiler_params=pltpu.CompilerParams(
            dimension_semantics=("parallel", "parallel", "arbitrary"),
            vmem_limit_bytes=_VMEM_LIMIT),
    )(x2, wt, b.reshape(1, N))


# --------------------------------------------------------------------------------------
# Flash attention kernel (per batch*head), online softmax over KV tiles.
# --------------------------------------------------------------------------------------
def _flash_attn_kernel(seed_ref, q_ref, k_ref, v_ref, o_ref,
                       m_sc, l_sc, acc_sc, *, scale, dropout_p, training):
    kv = pl.program_id(2)

    @pl.when(kv == 0)
    def _():
        m_sc[...] = jnp.full_like(m_sc, -jnp.inf)
        l_sc[...] = jnp.zeros_like(l_sc)
        acc_sc[...] = jnp.zeros_like(acc_sc)

    # scores for this (q-tile, kv-tile): bf16 MXU operands, f32 accumulate, then scale.
    s = jnp.einsum('bqd,bkd->bqk',
                   q_ref[...].astype(jnp.bfloat16),
                   k_ref[...].astype(jnp.bfloat16),
                   preferred_element_type=jnp.float32) * scale
    # TODO(synk): optional attention mask (scores.masked_fill(mask == 0, -1e9)) is not
    # wired up; this kernel implements the mask=None path of the module.

    m_prev = m_sc[...]
    m_new = jnp.maximum(m_prev, s.max(axis=-1, keepdims=True))
    alpha = jnp.exp(m_prev - m_new)                     # f32 elementwise (v5e-friendly)
    p = jnp.exp(s - m_new)                              # (1, tq, tkv) f32
    l_sc[...] = alpha * l_sc[...] + p.sum(axis=-1, keepdims=True)

    if training and dropout_p > 0.0:
        # torch: p_attn = dropout(softmax(scores)).  Equivalently drop the unnormalized
        # p feeding the accumulator while the denominator keeps the undropped sum.
        pltpu.prng_seed(seed_ref[0]
                        + pl.program_id(0) * pl.num_programs(1) * pl.num_programs(2)
                        + pl.program_id(1) * pl.num_programs(2)
                        + kv)
        bits = pltpu.bitcast(pltpu.prng_random_bits(p.shape), jnp.uint32)
        thresh = jnp.uint32(min(int(dropout_p * 4294967296.0), 4294967295))
        p = jnp.where(bits >= thresh, p * (1.0 / (1.0 - dropout_p)), 0.0)

    acc_sc[...] = alpha * acc_sc[...] + jnp.einsum(
        'bqk,bkd->bqd', p.astype(jnp.bfloat16), v_ref[...].astype(jnp.bfloat16),
        preferred_element_type=jnp.float32)
    m_sc[...] = m_new

    @pl.when(kv == pl.num_programs(2) - 1)
    def _():
        inv_l = pl.reciprocal(l_sc[...], approx=True)   # EUP slot, frees VALU
        o_ref[...] = (acc_sc[...] * inv_l).astype(o_ref.dtype)


def flash_attention_pallas(q3, k3, v3, *, dropout_p=0.0, training=False, seed=0,
                           tq_target=256, tkv_target=256):
    """q3/k3/v3: (B*h, S, d_k).  Returns softmax(q k^T / sqrt(d_k)) v per head."""
    BH, Sq, dk = q3.shape
    _, Sk, _ = k3.shape
    tq = _pick_tile(Sq, tq_target, 8)
    tkv = _pick_tile(Sk, tkv_target, 8)
    grid = (BH, Sq // tq, Sk // tkv)
    kernel = functools.partial(_flash_attn_kernel, scale=1.0 / math.sqrt(dk),
                               dropout_p=dropout_p, training=training)
    return pl.pallas_call(
        kernel,
        out_shape=jax.ShapeDtypeStruct((BH, Sq, dk), q3.dtype),
        grid=grid,
        in_specs=[
            pl.BlockSpec(memory_space=pltpu.MemorySpace.SMEM),        # seed scalar
            pl.BlockSpec((1, tq, dk), lambda b, qi, ki: (b, qi, 0)),  # q tile
            pl.BlockSpec((1, tkv, dk), lambda b, qi, ki: (b, ki, 0)), # k tile
            pl.BlockSpec((1, tkv, dk), lambda b, qi, ki: (b, ki, 0)), # v tile
        ],
        out_specs=pl.BlockSpec((1, tq, dk), lambda b, qi, ki: (b, qi, 0)),
        scratch_shapes=[
            pltpu.VMEM((1, tq, 1), jnp.float32),    # running max
            pltpu.VMEM((1, tq, 1), jnp.float32),    # running denom
            pltpu.VMEM((1, tq, dk), jnp.float32),   # accumulator
        ],
        compiler_params=pltpu.CompilerParams(
            dimension_semantics=("parallel", "parallel", "arbitrary"),
            vmem_limit_bytes=_VMEM_LIMIT),
    )(jnp.array([seed], dtype=jnp.int32), q3, k3, v3)


# --------------------------------------------------------------------------------------
# Full MultiHeadedAttention forward.
# --------------------------------------------------------------------------------------
def multi_headed_attention(query, key, value, params, *, h, mask=None,
                           dropout_p=0.1, training=False, seed=0):
    """Pallas forward pass of MultiHeadedAttention (mask=None path).

    params = (wq, bq, wk, bk, wv, bv, wo, bo); each w is (d_model, d_model) in
    (in_features, out_features) layout, i.e. torch `linear.weight.T`.
    """
    assert mask is None  # TODO(synk): mask support not implemented in the flash kernel
    B, Sq, D = query.shape
    _, Sk, _ = key.shape
    assert D % h == 0
    dk = D // h
    wq, bq, wk, bk, wv, bv, wo, bo = params

    def split_heads(y2, S):
        # (B*S, D) -> (B*h, S, dk)
        return (y2.reshape(B, S, h, dk).transpose(0, 2, 1, 3).reshape(B * h, S, dk))

    if query is key and key is value:
        # Self-attention fast path: one fused QKV matmul (N = 3D) instead of three.
        w_qkv = jnp.concatenate([wq, wk, wv], axis=1)          # (D, 3D)
        b_qkv = jnp.concatenate([bq, bk, bv], axis=0)          # (3D,)
        y = linear_pallas(query.reshape(-1, D), w_qkv, b_qkv)  # (B*Sq, 3D)
        q = split_heads(y[:, :D], Sq)
        k = split_heads(y[:, D:2 * D], Sk)
        v = split_heads(y[:, 2 * D:], Sk)
    else:
        q = split_heads(linear_pallas(query.reshape(-1, D), wq, bq), Sq)
        k = split_heads(linear_pallas(key.reshape(-1, D), wk, bk), Sk)
        v = split_heads(linear_pallas(value.reshape(-1, D), wv, bv), Sk)

    ctx = flash_attention_pallas(q, k, v, dropout_p=dropout_p,
                                 training=training, seed=seed)    # (B*h, Sq, dk)
    ctx = (ctx.reshape(B, h, Sq, dk).transpose(0, 2, 1, 3)
              .reshape(B * Sq, D))
    out = linear_pallas(ctx, wo, bo)                              # output projection
    return out.reshape(B, Sq, D)


# --------------------------------------------------------------------------------------
# Pure-JAX f32 reference (torch semantics, eval mode) and demo.
# --------------------------------------------------------------------------------------
def _reference_mha(query, key, value, params, h):
    wq, bq, wk, bk, wv, bv, wo, bo = params
    B, Sq, D = query.shape
    dk = D // h

    def split(x, w, b):
        B_, S_, _ = x.shape
        return (x @ w + b).reshape(B_, S_, h, dk).transpose(0, 2, 1, 3)

    q = split(query, wq, bq)
    k = split(key, wk, bk)
    v = split(value, wv, bv)
    scores = jnp.einsum('bhqd,bhkd->bhqk', q, k) / jnp.sqrt(jnp.float32(dk))
    p = jax.nn.softmax(scores, axis=-1)
    ctx = jnp.einsum('bhqk,bhkd->bhqd', p, v)
    ctx = ctx.transpose(0, 2, 1, 3).reshape(B, Sq, D)
    return ctx @ wo + bo


if __name__ == "__main__":
    B, S, H, D = 2, 8, 4, 32    # d_k = 8
    root = jax.random.PRNGKey(0)
    kx, *kp = jax.random.split(root, 9)

    x = jax.random.normal(kx, (B, S, D), dtype=jnp.float32)

    params = []
    for i in range(4):
        w = jax.random.normal(kp[2 * i], (D, D), dtype=jnp.float32) / math.sqrt(D)
        b = jax.random.normal(kp[2 * i + 1], (D,), dtype=jnp.float32) * 0.05
        params += [w, b]
    params = tuple(params)

    # Self-attention, eval mode (dropout == identity), no mask.
    out = multi_headed_attention(x, x, x, params, h=H, dropout_p=0.1,
                                 training=False, seed=0)
    out = jax.block_until_ready(out)

    ref = _reference_mha(x, x, x, params, h=H)
    assert out.shape == (B, S, D)
    # Tolerance accounts for bf16 MXU operands and the approx (EUP) reciprocal.
    assert jnp.allclose(out, ref, atol=5e-2, rtol=5e-2), (
        f"mismatch vs reference; max abs err = {jnp.max(jnp.abs(out - ref))}")

    print("KERNEL_OK")
</pallas_src>

<mosaic_0001>
module attributes {stable_mosaic.version = 11 : i64} {
  func.func @_linear_kernel(%arg0: i32, %arg1: i32, %arg2: i32, %arg3: memref<16x32xf32, #tpu.memory_space<vmem>>, %arg4: memref<32x96xf32, #tpu.memory_space<vmem>>, %arg5: memref<1x96xf32, #tpu.memory_space<vmem>>, %arg6: memref<16x96xf32, #tpu.memory_space<vmem>>, %arg7: memref<16x96xf32, #tpu.memory_space<vmem>>) attributes {dimension_semantics = [#tpu.dimension_semantics<parallel>, #tpu.dimension_semantics<parallel>, #tpu.dimension_semantics<arbitrary>], iteration_bounds = array<i64: 1, 1, 1>, scalar_prefetch = 0 : i64, scratch_operands = 1 : i64, tpu.core_type = #tpu.core_type<tc>, window_params = [{transform_indices = @transform_0, window_bounds = array<i64: 16, 32>}, {transform_indices = @transform_1, window_bounds = array<i64: 32, 96>}, {transform_indices = @transform_2, window_bounds = array<i64: 1, 96>}, {transform_indices = @transform_3, window_bounds = array<i64: 16, 96>}]} {
    %c0_i32 = arith.constant 0 : i32
    %0 = arith.cmpi eq, %arg2, %c0_i32 : i32
    %1 = arith.extui %0 : i1 to i32
    %c0_i32_0 = arith.constant 0 : i32
    %2 = arith.cmpi ne, %1, %c0_i32_0 : i32
    scf.if %2 {
      %cst_10 = arith.constant 0.000000e+00 : f32
      %14 = vector.broadcast %cst_10 : f32 to vector<16x96xf32>
      %c0_11 = arith.constant 0 : index
      %c0_12 = arith.constant 0 : index
      %15 = vector.load %arg7[%c0_11, %c0_12] : memref<16x96xf32, #tpu.memory_space<vmem>>, vector<16x96xf32>
      tpu.vector_store %arg7[%c0_11, %c0_12], %14 {strides = array<i32>} : memref<16x96xf32, #tpu.memory_space<vmem>>, vector<16x96xf32>,
    } else {
    }
    %c0 = arith.constant 0 : index
    %c0_1 = arith.constant 0 : index
    %3 = vector.load %arg7[%c0, %c0_1] : memref<16x96xf32, #tpu.memory_space<vmem>>, vector<16x96xf32>
    %c0_2 = arith.constant 0 : index
    %c0_3 = arith.constant 0 : index
    %4 = vector.load %arg3[%c0_2, %c0_3] : memref<16x32xf32, #tpu.memory_space<vmem>>, vector<16x32xf32>
    %5 = arith.truncf %4 : vector<16x32xf32> to vector<16x32xbf16>
    %c0_4 = arith.constant 0 : index
    %c0_5 = arith.constant 0 : index
    %6 = vector.load %arg4[%c0_4, %c0_5] : memref<32x96xf32, #tpu.memory_space<vmem>>, vector<32x96xf32>
    %7 = arith.truncf %6 : vector<32x96xf32> to vector<32x96xbf16>
    %cst = arith.constant dense<0.000000e+00> : vector<16x96xf32>
    %8 = tpu.matmul %5, %7, %cst {dimension_numbers = #tpu.dot_dimension_numbers<[1], [0], [0], [1], [0, 0, 1, 1], [], []>} : vector<16x32xbf16>, vector<32x96xbf16>, vector<16x96xf32> -> vector<16x96xf32>
    %9 = arith.addf %3, %8 : vector<16x96xf32>
    %c0_6 = arith.constant 0 : index
    %c0_7 = arith.constant 0 : index
    %10 = vector.load %arg7[%c0_6, %c0_7] : memref<16x96xf32, #tpu.memory_space<vmem>>, vector<16x96xf32>
    tpu.vector_store %arg7[%c0_6, %c0_7], %9 {strides = array<i32>} : memref<16x96xf32, #tpu.memory_space<vmem>>, vector<16x96xf32>,
    %c0_i32_8 = arith.constant 0 : i32
    %11 = arith.cmpi eq, %arg2, %c0_i32_8 : i32
    %12 = arith.extui %11 : i1 to i32
    %c0_i32_9 = arith.constant 0 : i32
    %13 = arith.cmpi ne, %12, %c0_i32_9 : i32
    scf.if %13 {
      %c0_10 = arith.constant 0 : index
      %c0_11 = arith.constant 0 : index
      %14 = vector.load %arg7[%c0_10, %c0_11] : memref<16x96xf32, #tpu.memory_space<vmem>>, vector<16x96xf32>
      %c0_12 = arith.constant 0 : index
      %c0_13 = arith.constant 0 : index
      %15 = vector.load %arg5[%c0_12, %c0_13] : memref<1x96xf32, #tpu.memory_space<vmem>>, vector<1x96xf32>
      %16 = vector.broadcast %15 : vector<1x96xf32> to vector<16x96xf32>
      %17 = arith.addf %14, %16 : vector<16x96xf32>
      %c0_14 = arith.constant 0 : index
      %c0_15 = arith.constant 0 : index
      %18 = vector.load %arg6[%c0_14, %c0_15] : memref<16x96xf32, #tpu.memory_space<vmem>>, vector<16x96xf32>
      tpu.vector_store %arg6[%c0_14, %c0_15], %17 {strides = array<i32>} : memref<16x96xf32, #tpu.memory_space<vmem>>, vector<16x96xf32>,
    } else {
    }
    return
  }
  func.func @transform_0(%arg0: i32, %arg1: i32, %arg2: i32) -> (i32, i32) {
    %c0_i32 = arith.constant 0 : i32
    return %arg0, %arg2 : i32, i32
  }
  func.func @transform_1(%arg0: i32, %arg1: i32, %arg2: i32) -> (i32, i32) {
    %c0_i32 = arith.constant 0 : i32
    return %arg2, %arg1 : i32, i32
  }
  func.func @transform_2(%arg0: i32, %arg1: i32, %arg2: i32) -> (i32, i32) {
    %c0_i32 = arith.constant 0 : i32
    %c0_i32_0 = arith.constant 0 : i32
    return %c0_i32, %arg1 : i32, i32
  }
  func.func @transform_3(%arg0: i32, %arg1: i32, %arg2: i32) -> (i32, i32) {
    %c0_i32 = arith.constant 0 : i32
    return %arg0, %arg1 : i32, i32
  }
}

</mosaic_0001>

<llo_original>
// kernel: tpu_custom_call.1
$region0: #{tpu_custom_call.1}
  #allocation0 [shape = 'u32[]', space=smem, size = 0x4, offset = 0x4, fixed_abs, tag = 'smem constant byte address 0x4 - core index']
  #allocation1 [shape = 'u32[144,128]{1,0:T(1,128)}', space=vmem, size = 0x12000, scoped, tag = 'internal scratch']
  #allocation2 [shape = 'f32[16,96]{1,0:T(8,128)}', space=vmem, size = 0x2000, scoped, tag = 'scratch operand']
  %s0 = inlined_call_operand.hbm [shape: f32[16,32], index: 0, kind: input, shape index: {}]
  %s1 = inlined_call_operand.hbm [shape: f32[32,96], index: 1, kind: input, shape index: {}]
  %s2 = inlined_call_operand.vmem [shape: f32[1,96], index: 2, kind: input, shape index: {}]
  %s3 = inlined_call_operand.hbm [shape: f32[16,96], index: 3, kind: output, shape index: {}]
  %s4 = sld [smem:[#allocation0]]
  $region38: #{tpu_custom_call.1} parent=0
    _
  %s6 = ssub.s32 1, %s4
  %s7 = scalar_select 0, %s6, %s4
  $region1: #{tpu_custom_call.1} parent=0
    #allocation3 [shape = 'u8[8192]{0}', space=vmem, size = 0x2000, scoped, tag = 'input window, operand 0, single buffered']
    #allocation4 [shape = 's32[1]{0}', space=sflag, size = 0x4, scoped, tag = 'scoped memory for tpu_custom_call.1']
    #allocation5 [shape = 's32[1]{0}', space=sflag, size = 0x4, scoped, tag = 'scoped memory for tpu_custom_call.1']
    #allocation6 [shape = 'u8[16384]{0}', space=vmem, size = 0x4000, scoped, tag = 'input window, operand 1, single buffered']
    #allocation7 [shape = 's32[1]{0}', space=sflag, size = 0x4, scoped, tag = 'scoped memory for tpu_custom_call.1']
    #allocation8 [shape = 'u8[8192]{0}', space=vmem, size = 0x2000, scoped, tag = 'output window, operand 0, single buffered']
    %8 = vsyncpa [#allocation4], 0
    %9 = vsyncpa [#allocation7], 0
    %10 = vsyncpa [#allocation5], 0
    // Predicated region
    $region2: #{tpu_custom_call.1} parent=1 // pred_check
      _
    $region3: #{tpu_custom_call.1} parent=1 // pred_check_branch
      %12 = sbr.rel (0) target = $region5
    $region4: #{tpu_custom_call.1} parent=1 // pred_region
      %s14 = ssub.s32 256, 256
      %15 = vsyncadd [#allocation4], %s14
      %s16 = sshll.u32 [#allocation3], 4
      %s17 = int_to_ptr.vmem [resolvable:$true] %s16
      %22 = dma.hbm_to_vmem [thread:$0]  %s0, 256, %s17, [#allocation4], 128, 128, 8
    $region5: #{tpu_custom_call.1} parent=1 // pred_fallthru
      _
    // Predicated region
    $region6: #{tpu_custom_call.1} parent=1 // pred_check
      _
    $region7: #{tpu_custom_call.1} parent=1 // pred_check_branch
      %24 = sbr.rel (0) target = $region9
    $region8: #{tpu_custom_call.1} parent=1 // pred_region
      %s26 = ssub.s32 512, 512
      %27 = vsyncadd [#allocation7], %s26
      %s28 = sshll.u32 [#allocation6], 4
      %s29 = int_to_ptr.vmem [resolvable:$true] %s28
      %34 = dma.hbm_to_vmem [thread:$0]  %s1, 512, %s29, [#allocation7], 128, 128, 8
    $region9: #{tpu_custom_call.1} parent=1 // pred_fallthru
      _
    // Predicated region
    $region10: #{tpu_custom_call.1} parent=1 // pred_check
      _
    $region11: #{tpu_custom_call.1} parent=1 // pred_check_branch
      %36 = sbr.rel (0) target = $region13
    $region12: #{tpu_custom_call.1} parent=1 // pred_region
      _
    $region13: #{tpu_custom_call.1} parent=1 // pred_fallthru
      _
    // Predicated region
    $region14: #{tpu_custom_call.1} parent=1 // pred_check
      _
    $region15: #{tpu_custom_call.1} parent=1 // pred_check_branch
      %38 = sbr.rel (0) target = $region17
    $region16: #{tpu_custom_call.1} parent=1 // pred_region
      %39 = dma.done [#allocation4], 256
    $region17: #{tpu_custom_call.1} parent=1 // pred_fallthru
      _
    // Predicated region
    $region18: #{tpu_custom_call.1} parent=1 // pred_check
      _
    $region19: #{tpu_custom_call.1} parent=1 // pred_check_branch
      %41 = sbr.rel (0) target = $region21
    $region20: #{tpu_custom_call.1} parent=1 // pred_region
      %42 = dma.done [#allocation7], 512
    $region21: #{tpu_custom_call.1} parent=1 // pred_fallthru
      _
    %p44 = scmp.eq.s32.totalorder 0, 0
    // Predicated region
    $region22: #{tpu_custom_call.1} parent=1 // pred_check
      %p45 = pneg %p44
    $region23: #{tpu_custom_call.1} parent=1 // pred_check_branch
      %47 = sbr.rel (%p45) target = $region25
    $region24: #{tpu_custom_call.1} parent=1 // pred_region
      %vm48 = vcmask 785408
      %49 = vst.msk [vmem:[#allocation2] sm:$0xff] %vm48, 0.0
      %50 = vst.msk [vmem:[#allocation2 + $0x8] sm:$0xff] %vm48, 0.0
    $region25: #{tpu_custom_call.1} parent=1 // pred_fallthru
      _
    %v51 = vld [vmem:[#allocation2] sm:$0xff]
    %v52 = vld [vmem:[#allocation2 + $0x8] sm:$0xff]
    %v53 = vld [vmem:[#allocation3] sm:$0xff]
    %v54 = vld [vmem:[#allocation3 + $0x8] sm:$0xff]
    %v55 = vpack.c.bf16 %v54, %v53
    %v56 = vld [vmem:[#allocation6] sm:$0xff]
    %v57 = vld [vmem:[#allocation6 + $0x8] sm:$0xff]
    %v58 = vld [vmem:[#allocation6 + $0x10] sm:$0xff]
    %v59 = vld [vmem:[#allocation6 + $0x18] sm:$0xff]
    %v60 = vpack.c.bf16 %v57, %v56
    %v61 = vpack.c.bf16 %v59, %v58
    %vm62 = vcmask 261120
    %v64 = vsel %vm62, %v55, 0
    %66 = vmatprep.subr.bf16.mxu0 0
    %67 = vmatpush1.bf16.msra.mxu0 %v60
    %68 = vmatprep.subr.bf16.mxu0 0
    %69 = vmatpush1.bf16.msra.mxu0 %v61
    %70 = vmatprep.subr.bf16.mxu0 0
    %71 = vmatpush1.bf16.msra.mxu0 0
    %72 = vmatprep.subr.bf16.mxu0 0
    %73 = vmatpush1.bf16.msra.mxu0 0
    %74 = vmatprep.subr.bf16.mxu0 0
    %75 = vmatpush1.bf16.msra.mxu0 0
    %76 = vmatprep.subr.bf16.mxu0 0
    %77 = vmatpush1.bf16.msra.mxu0 0
    %78 = vmatprep.subr.bf16.mxu0 0
    %79 = vmatpush1.bf16.msra.mxu0 0
    %80 = vmatprep.subr.bf16.mxu0 0
    %81 = vmatpush1.bf16.msra.mxu0 0
    %82 = vmatprep.subr.bf16.mxu0 0
    %83 = vmatpush1.bf16.msra.mxu0 0
    %84 = vmatprep.subr.bf16.mxu0 0
    %85 = vmatpush1.bf16.msra.mxu0 0
    %86 = vmatprep.subr.bf16.mxu0 0
    %87 = vmatpush1.bf16.msra.mxu0 0
    %88 = vmatprep.subr.bf16.mxu0 0
    %89 = vmatpush1.bf16.msra.mxu0 0
    %90 = vmatprep.subr.bf16.mxu0 0
    %91 = vmatpush1.bf16.msra.mxu0 0
    %92 = vmatprep.subr.bf16.mxu0 0
    %93 = vmatpush1.bf16.msra.mxu0 0
    %94 = vmatprep.subr.bf16.mxu0 0
    %95 = vmatpush1.bf16.msra.mxu0 0
    %96 = vmatprep.subr.bf16.mxu0 0
    %97 = vmatpush1.bf16.msra.mxu0 0
    %98 = vmatprep.mubr.bf16.mxu0 0
    %99 = vmatmul.mubr.bf16.gmra.mrb[0].mxu0 %v64
    %v100 = vpop.f32.mrb[0].mxu0
    %v101 = vadd.f32 0.0, %v100
    %v102 = vpop.f32.mrb[0].mxu0
    %v103 = vpop.f32.mrb[0].mxu0
    %v104 = vadd.f32 0.0, %v103
    %v105 = vpop.f32.mrb[0].mxu0
    %106 = vdwg.mxu0
    %v107 = vadd.f32 %v51, %v101
    %v108 = vadd.f32 %v52, %v104
    %vm109 = vcmask 785408
    %110 = vst.msk [vmem:[#allocation2] sm:$0xff] %vm109, %v107
    %111 = vst.msk [vmem:[#allocation2 + $0x8] sm:$0xff] %vm109, %v108
    // Predicated region
    $region26: #{tpu_custom_call.1} parent=1 // pred_check
      %p112 = pneg %p44
    $region27: #{tpu_custom_call.1} parent=1 // pred_check_branch
      %114 = sbr.rel (%p112) target = $region29
    $region28: #{tpu_custom_call.1} parent=1 // pred_region
      %v115 = vld [vmem:[#allocation2] sm:$0xff]
      %v116 = vld [vmem:[#allocation2 + $0x8] sm:$0xff]
      %v117 = vld [vmem:[%s2] sm:$0x1]
      %v119 = vlaneseq
      %v120 = vshrl.u32 %v119, 7
      %v121 = vsub.s32 0, %v120
      %v122 = vrot.slane %v117, %v121
      %v124 = vadd.f32 %v115, %v122
      %v125 = vadd.f32 %v116, %v122
      %126 = vst.msk [vmem:[#allocation8] sm:$0xff] %vm109, %v124
      %127 = vst.msk [vmem:[#allocation8 + $0x8] sm:$0xff] %vm109, %v125
    $region29: #{tpu_custom_call.1} parent=1 // pred_fallthru
      _
    // Predicated region
    $region30: #{tpu_custom_call.1} parent=1 // pred_check
      _
    $region31: #{tpu_custom_call.1} parent=1 // pred_check_branch
      %129 = sbr.rel (0) target = $region33
    $region32: #{tpu_custom_call.1} parent=1 // pred_region
      %s131 = ssub.s32 256, 256
      %132 = vsyncadd [#allocation5], %s131
      %s133 = sshll.u32 [#allocation8], 4
      %s134 = int_to_ptr.vmem [resolvable:$true] %s133
      %139 = dma.vmem_to_hbm [thread:$0]  %s134, 256, %s3, [#allocation5], 128, 128, 8
    $region33: #{tpu_custom_call.1} parent=1 // pred_fallthru
      _
    // Predicated region
    $region34: #{tpu_custom_call.1} parent=1 // pred_check
      _
    $region35: #{tpu_custom_call.1} parent=1 // pred_check_branch
      %141 = sbr.rel (0) target = $region37
    $region36: #{tpu_custom_call.1} parent=1 // pred_region
      %142 = dma.done [#allocation5], 256
    $region37: #{tpu_custom_call.1} parent=1 // pred_fallthru
      _
    %143 = vsyncpa [#allocation4], 1
    %144 = vsyncpa [#allocation7], 1
    %145 = vsyncpa [#allocation5], 1

</llo_original>
